<compile_context>
chip_gen: v5e
topology: v5e:2x2
jax: 0.10.0
libtpu: 0.0.40
codegen_flags: <defaults>
</compile_context>

<pallas_src>
import functools

import jax
import jax.numpy as jnp
from jax import lax
from jax.experimental import pallas as pl
from jax.experimental.pallas import tpu as pltpu

IN_DIM = 768
HID_DIM = 100
HID_PAD = 128          # lane-dense padding of the hidden dim
OUT_DIM = 2
BN_EPS = 1e-5


def _round_up(x, m):
    return (x + m - 1) // m * m


def _kernel(x_ref, w1_ref, gamma_ref, beta_ref, w2_ref, b2_ref,
            out_ref, h_ref, sum_ref, sq_ref, *,
            true_batch, tile_b, n_tiles, mxu_dtype, ragged):
    i = pl.program_id(0)

    # ---------------- pass 0 (steps 0..nt-1): fc1 + BN statistics ----------------
    @pl.when(i < n_tiles)
    def _fc1_and_stats():
        @pl.when(i == 0)
        def _init():
            sum_ref[...] = jnp.zeros_like(sum_ref)   # running sum of h
            sq_ref[...] = jnp.zeros_like(sq_ref)     # running sum of h*h

        # x arrives in its native dtype; cast to the MXU dtype just before the dot
        # (no-op when they already match). b1 is intentionally dropped: a per-feature
        # bias cancels exactly under training-mode BatchNorm.
        xv = x_ref[...].astype(mxu_dtype)
        h = jnp.dot(xv, w1_ref[...], preferred_element_type=jnp.float32)

        if ragged:
            # Rows past the true batch (ragged last tile) read unspecified HBM data:
            # zero them so they contribute nothing to stats (and stay finite downstream).
            rows = i * tile_b + lax.broadcasted_iota(jnp.int32, (tile_b, 1), 0)
            h = jnp.where(rows < true_batch, h, 0.0)

        row = pl.multiple_of(i * tile_b, tile_b)
        h_ref[pl.ds(row, tile_b), :] = h.astype(h_ref.dtype)
        # f32 statistics from the fresh f32 accumulator (independent of scratch dtype).
        sum_ref[...] += jnp.sum(h, axis=0, keepdims=True)
        sq_ref[...] += jnp.sum(h * h, axis=0, keepdims=True)

    # ------- pass 1 (single final step): BN affine + ReLU + fc2 + log-softmax -------
    @pl.when(i == n_tiles)
    def _apply():
        inv_b = jnp.float32(1.0 / true_batch)        # divide by the REAL batch size
        mean = sum_ref[...] * inv_b
        # TODO(synk): E[h^2]-mean^2 in f32 can lose precision for very large batches;
        #             switch to per-tile centered sums if batches approach the VMEM cap.
        var = sq_ref[...] * inv_b - mean * mean       # biased variance (training BN)
        scale = gamma_ref[...] * lax.rsqrt(var + BN_EPS)
        shift = beta_ref[...] - mean * scale
        w2 = w2_ref[...]
        b2 = b2_ref[...]

        def chunk(row):
            h = h_ref[pl.ds(row, tile_b), :].astype(jnp.float32)
            h = jnp.maximum(h * scale + shift, 0.0)          # fused BN affine + ReLU
            logits = jnp.dot(h.astype(w2.dtype), w2,
                             preferred_element_type=jnp.float32) + b2
            # Closed-form 2-class log-softmax (no cross-lane max/sum reductions).
            d = logits[:, 1:2] - logits[:, 0:1]
            softplus_d = jnp.maximum(d, 0.0) + jnp.log1p(jnp.exp(-jnp.abs(d)))
            lse = logits[:, 0:1] + softplus_d
            out_ref[pl.ds(row, tile_b), :] = (logits - lse).astype(out_ref.dtype)

        if n_tiles <= 8:                  # short, static trip count: fully unroll
            for c in range(n_tiles):
                chunk(c * tile_b)
        else:
            @pl.loop(0, n_tiles)
            def _(c):
                chunk(pl.multiple_of(c * tile_b, tile_b))


def _const_spec(shape):
    """VMEM-resident parameter: constant block index; single-buffered when supported."""
    index_map = lambda i: (0,) * len(shape)
    try:
        return pl.BlockSpec(shape, index_map, pipeline_mode=pl.Buffered(1))
    except (TypeError, AttributeError):   # older jax: no pipeline_mode / Buffered
        return pl.BlockSpec(shape, index_map)


@functools.partial(jax.jit, static_argnames=("block_b", "mxu_dtype"))
def mlp_domain_classifier(x, w1, b1, gamma, beta, w2, b2, *,
                          block_b=1024, mxu_dtype=jnp.bfloat16):
    """x: [B, 768] (any float dtype). Returns log-probabilities [B, 2] f32 (training BN).

    mxu_dtype=jnp.bfloat16 is the production path on all generations (v5e MXU is
    bf16/int-only); mxu_dtype=jnp.float32 is the correctness oracle.
    """
    del b1  # exact cancellation under training-mode BatchNorm (see kernel comment)
    B, in_dim = x.shape
    assert in_dim == IN_DIM
    assert block_b % 8 == 0

    tb = min(block_b, _round_up(B, 8))     # batch tile (multiple of 8 sublanes)
    nt = pl.cdiv(B, tb)
    b_pad = nt * tb
    ragged = (b_pad != B)

    # ---- wrapper-side layout plumbing: tiny params only (x is NOT copied/padded) ----
    w1p = jnp.zeros((IN_DIM, HID_PAD), mxu_dtype).at[:, :HID_DIM].set(w1.astype(mxu_dtype))
    gammap = jnp.zeros((1, HID_PAD), jnp.float32).at[:, :HID_DIM].set(
        gamma.reshape(1, HID_DIM).astype(jnp.float32))
    betap = jnp.zeros((1, HID_PAD), jnp.float32).at[:, :HID_DIM].set(
        beta.reshape(1, HID_DIM).astype(jnp.float32))
    w2p = jnp.zeros((HID_PAD, OUT_DIM), mxu_dtype).at[:HID_DIM, :].set(w2.astype(mxu_dtype))
    b2p = b2.reshape(1, OUT_DIM).astype(jnp.float32)

    # ---- generation-aware VMEM budget ----
    try:
        vmem_cap = int(pltpu.get_tpu_info().vmem_capacity_bytes)
    except Exception:
        vmem_cap = 64 * 2**20              # conservative fallback (v7x per-core VMEM)

    x_itemsize = jnp.dtype(x.dtype).itemsize
    w_itemsize = jnp.dtype(mxu_dtype).itemsize
    h_bytes = b_pad * HID_PAD * w_itemsize                 # resident fc1 activations
    fixed_bytes = (2 * tb * IN_DIM * x_itemsize            # double-buffered x tiles
                   + 2 * IN_DIM * HID_PAD * w_itemsize     # W1 (<= 2 copies)
                   + 2 * b_pad * OUT_DIM * 4               # resident output block
                   + 16 * HID_PAD * 4                      # gamma/beta/W2/b2/stat scratch
                   + 2 * 2**20)                            # compiler temporaries / slack
    if h_bytes + fixed_bytes > vmem_cap:
        # TODO(synk): for larger batches spill h to HBM (or recompute fc1 in pass 1) and
        #             shard the batch across v7x's 2 TensorCores with a cross-core
        #             BN-stat reduction.
        raise ValueError(
            f"batch {B} needs ~{(h_bytes + fixed_bytes) >> 20} MiB VMEM "
            f"(capacity {vmem_cap >> 20} MiB); split the batch in the caller.")
    vmem_limit = int(min(vmem_cap, max(32 * 2**20, h_bytes + fixed_bytes)))

    grid_spec = pltpu.PrefetchScalarGridSpec(
        num_scalar_prefetch=0,
        grid=(nt + 1,),
        in_specs=[
            # x: walk batch tiles in steps 0..nt-1; park on the last tile during the
            # final step (same block index -> no extra DMA).
            pl.BlockSpec((tb, IN_DIM), lambda i: (jnp.minimum(i, nt - 1), 0)),
            _const_spec((IN_DIM, HID_PAD)),     # W1 (VMEM-resident)
            _const_spec((1, HID_PAD)),          # gamma
            _const_spec((1, HID_PAD)),          # beta
            _const_spec((HID_PAD, OUT_DIM)),    # W2
            _const_spec((1, OUT_DIM)),          # b2
        ],
        # Whole output is one VMEM-resident block, fully written in the final step and
        # written back once at the end of the grid.
        out_specs=pl.BlockSpec((b_pad, OUT_DIM), lambda i: (0, 0)),
        scratch_shapes=[
            pltpu.VMEM((b_pad, HID_PAD), mxu_dtype),   # resident fc1 activations
            pltpu.VMEM((1, HID_PAD), jnp.float32),     # sum(h)
            pltpu.VMEM((1, HID_PAD), jnp.float32),     # sum(h*h)
        ],
    )

    out_pad = pl.pallas_call(
        functools.partial(_kernel, true_batch=B, tile_b=tb, n_tiles=nt,
                          mxu_dtype=mxu_dtype, ragged=ragged),
        out_shape=jax.ShapeDtypeStruct((b_pad, OUT_DIM), jnp.float32),
        grid_spec=grid_spec,
        compiler_params=pltpu.CompilerParams(
            # BN stats accumulate sequentially across batch tiles.
            dimension_semantics=("arbitrary",),
            vmem_limit_bytes=vmem_limit,
        ),
    )(x, w1p, gammap, betap, w2p, b2p)
    return out_pad[:B] if ragged else out_pad


def reference_forward(x, w1, b1, gamma, beta, w2, b2):
    """Pure-JAX reference matching the PyTorch module (training-mode BN)."""
    h = jnp.dot(x, w1, precision=lax.Precision.HIGHEST) + b1
    mean = jnp.mean(h, axis=0, keepdims=True)
    var = jnp.mean((h - mean) ** 2, axis=0, keepdims=True)       # biased variance
    h = (h - mean) / jnp.sqrt(var + BN_EPS) * gamma + beta
    h = jnp.maximum(h, 0.0)
    logits = jnp.dot(h, w2, precision=lax.Precision.HIGHEST) + b2
    return jax.nn.log_softmax(logits, axis=1)


if __name__ == "__main__":
    key = jax.random.PRNGKey(0)
    kx, k1, k2, k3, k4, k5, k6 = jax.random.split(key, 7)

    B = 30          # small batch, deliberately NOT a multiple of 8 (ragged last tile)
    BLOCK_B = 8     # tiny tile so the multi-tile grid (4 tiles + finalize) is exercised

    bound1 = 1.0 / jnp.sqrt(IN_DIM)
    bound2 = 1.0 / jnp.sqrt(HID_DIM)
    x = jax.random.normal(kx, (B, IN_DIM), jnp.float32)
    w1 = jax.random.uniform(k1, (IN_DIM, HID_DIM), jnp.float32, -bound1, bound1)
    b1 = jax.random.uniform(k2, (HID_DIM,), jnp.float32, -bound1, bound1)
    gamma = 1.0 + 0.1 * jax.random.normal(k3, (HID_DIM,), jnp.float32)
    beta = 0.1 * jax.random.normal(k4, (HID_DIM,), jnp.float32)
    w2 = jax.random.uniform(k5, (HID_DIM, OUT_DIM), jnp.float32, -bound2, bound2)
    b2 = jax.random.uniform(k6, (OUT_DIM,), jnp.float32, -bound2, bound2)

    ref = reference_forward(x, w1, b1, gamma, beta, w2, b2)

    # 1) Exact-semantics oracle: f32 MXU inputs, multi-tile grid + ragged masking.
    out_f32 = jax.block_until_ready(
        mlp_domain_classifier(x, w1, b1, gamma, beta, w2, b2,
                              block_b=BLOCK_B, mxu_dtype=jnp.float32))
    assert out_f32.shape == (B, OUT_DIM)
    assert jnp.allclose(out_f32, ref, atol=1e-4, rtol=1e-4), "f32 kernel vs reference mismatch"

    # 2) Production path: bf16 MXU inputs + bf16 resident activations, same tiny tiles.
    out_bf16 = jax.block_until_ready(
        mlp_domain_classifier(x, w1, b1, gamma, beta, w2, b2,
                              block_b=BLOCK_B, mxu_dtype=jnp.bfloat16))
    assert out_bf16.shape == (B, OUT_DIM)
    assert jnp.allclose(out_bf16, ref, atol=3e-2, rtol=3e-2), "bf16 kernel vs reference mismatch"

    # 3) Default (large) batch tile -> single fc1 tile + finalize step.
    out_def = jax.block_until_ready(
        mlp_domain_classifier(x, w1, b1, gamma, beta, w2, b2))
    assert out_def.shape == (B, OUT_DIM)
    assert jnp.allclose(out_def, ref, atol=3e-2, rtol=3e-2), "default-path kernel mismatch"

    print("KERNEL_OK")
</pallas_src>

<mosaic_0001>
module attributes {stable_mosaic.version = 11 : i64} {
  func.func @_kernel(%arg0: i32, %arg1: memref<8x768xf32, #tpu.memory_space<vmem>>, %arg2: memref<768x128xf32, #tpu.memory_space<vmem>>, %arg3: memref<1x128xf32, #tpu.memory_space<vmem>>, %arg4: memref<1x128xf32, #tpu.memory_space<vmem>>, %arg5: memref<128x2xf32, #tpu.memory_space<vmem>>, %arg6: memref<1x2xf32, #tpu.memory_space<vmem>>, %arg7: memref<32x2xf32, #tpu.memory_space<vmem>>, %arg8: memref<32x128xf32, #tpu.memory_space<vmem>>, %arg9: memref<1x128xf32, #tpu.memory_space<vmem>>, %arg10: memref<1x128xf32, #tpu.memory_space<vmem>>) attributes {dimension_semantics = [#tpu.dimension_semantics<arbitrary>], iteration_bounds = array<i64: 5>, scalar_prefetch = 0 : i64, scratch_operands = 3 : i64, tpu.core_type = #tpu.core_type<tc>, window_params = [{transform_indices = @transform_0, window_bounds = array<i64: 8, 768>}, {pipeline_mode = #tpu.pipeline_mode<synchronous>, transform_indices = @transform_1, window_bounds = array<i64: 768, 128>}, {pipeline_mode = #tpu.pipeline_mode<synchronous>, transform_indices = @transform_2, window_bounds = array<i64: 1, 128>}, {pipeline_mode = #tpu.pipeline_mode<synchronous>, transform_indices = @transform_3, window_bounds = array<i64: 1, 128>}, {pipeline_mode = #tpu.pipeline_mode<synchronous>, transform_indices = @transform_4, window_bounds = array<i64: 128, 2>}, {pipeline_mode = #tpu.pipeline_mode<synchronous>, transform_indices = @transform_5, window_bounds = array<i64: 1, 2>}, {pipeline_mode = #tpu.pipeline_mode<synchronous>, transform_indices = @transform_6, window_bounds = array<i64: 32, 2>}]} {
    %c4_i32 = arith.constant 4 : i32
    %0 = arith.cmpi slt, %arg0, %c4_i32 : i32
    %1 = arith.extui %0 : i1 to i32
    %c0_i32 = arith.constant 0 : i32
    %2 = arith.cmpi ne, %1, %c0_i32 : i32
    scf.if %2 {
      %c0_i32_2 = arith.constant 0 : i32
      %6 = arith.cmpi eq, %arg0, %c0_i32_2 : i32
      %7 = arith.extui %6 : i1 to i32
      %c0_i32_3 = arith.constant 0 : i32
      %8 = arith.cmpi ne, %7, %c0_i32_3 : i32
      scf.if %8 {
        %cst_20 = arith.constant 0.000000e+00 : f32
        %37 = vector.broadcast %cst_20 : f32 to vector<1x128xf32>
        %c0_21 = arith.constant 0 : index
        %c0_22 = arith.constant 0 : index
        %38 = vector.load %arg9[%c0_21, %c0_22] : memref<1x128xf32, #tpu.memory_space<vmem>>, vector<1x128xf32>
        tpu.vector_store %arg9[%c0_21, %c0_22], %37 {strides = array<i32>} : memref<1x128xf32, #tpu.memory_space<vmem>>, vector<1x128xf32>,
        %cst_23 = arith.constant 0.000000e+00 : f32
        %39 = vector.broadcast %cst_23 : f32 to vector<1x128xf32>
        %c0_24 = arith.constant 0 : index
        %c0_25 = arith.constant 0 : index
        %40 = vector.load %arg10[%c0_24, %c0_25] : memref<1x128xf32, #tpu.memory_space<vmem>>, vector<1x128xf32>
        tpu.vector_store %arg10[%c0_24, %c0_25], %39 {strides = array<i32>} : memref<1x128xf32, #tpu.memory_space<vmem>>, vector<1x128xf32>,
      } else {
      }
      %c0 = arith.constant 0 : index
      %c0_4 = arith.constant 0 : index
      %9 = vector.load %arg1[%c0, %c0_4] : memref<8x768xf32, #tpu.memory_space<vmem>>, vector<8x768xf32>
      %c0_5 = arith.constant 0 : index
      %c0_6 = arith.constant 0 : index
      %10 = vector.load %arg2[%c0_5, %c0_6] : memref<768x128xf32, #tpu.memory_space<vmem>>, vector<768x128xf32>
      %cst = arith.constant dense<0.000000e+00> : vector<8x128xf32>
      %11 = tpu.matmul %9, %10, %cst {dimension_numbers = #tpu.dot_dimension_numbers<[1], [0], [0], [1], [0, 0, 1, 1], [], []>} : vector<8x768xf32>, vector<768x128xf32>, vector<8x128xf32> -> vector<8x128xf32>
      %c8_i32 = arith.constant 8 : i32
      %12 = arith.muli %arg0, %c8_i32 : i32
      %13 = tpu.iota {dimensions = array<i32: 0>} : vector<8x1xi32>
      %14 = vector.broadcast %12 : i32 to vector<8x1xi32>
      %15 = arith.addi %14, %13 : vector<8x1xi32>
      %c30_i32 = arith.constant 30 : i32
      %16 = vector.broadcast %c30_i32 : i32 to vector<8x1xi32>
      %17 = arith.cmpi slt, %15, %16 : vector<8x1xi32>
      %cst_7 = arith.constant 0.000000e+00 : f32
      %18 = vector.shape_cast %17 : vector<8x1xi1> to vector<8x1xi1>
      %19 = vector.broadcast %18 : vector<8x1xi1> to vector<8x128xi1>
      %20 = vector.broadcast %cst_7 : f32 to vector<8x128xf32>
      %21 = arith.select %19, %11, %20 : vector<8x128xi1>, vector<8x128xf32>
      %c8_i32_8 = arith.constant 8 : i32
      %22 = arith.muli %arg0, %c8_i32_8 : i32
      %23 = tpu.assume_multiple %22, 8 : i32
      %24 = arith.index_cast %23 : i32 to index
      %c0_9 = arith.constant 0 : index
      %25 = vector.load %arg8[%24, %c0_9] : memref<32x128xf32, #tpu.memory_space<vmem>>, vector<8x128xf32>
      tpu.vector_store %arg8[%24, %c0_9], %21 {strides = array<i32>} : memref<32x128xf32, #tpu.memory_space<vmem>>, vector<8x128xf32>,
      %c0_10 = arith.constant 0 : index
      %c0_11 = arith.constant 0 : index
      %26 = vector.load %arg9[%c0_10, %c0_11] : memref<1x128xf32, #tpu.memory_space<vmem>>, vector<1x128xf32>
      %cst_12 = arith.constant dense<0.000000e+00> : vector<128xf32>
      %27 = vector.multi_reduction <add>, %21, %cst_12 [0] : vector<8x128xf32> to vector<128xf32>
      %28 = vector.shape_cast %27 : vector<128xf32> to vector<1x128xf32>
      %29 = arith.addf %26, %28 : vector<1x128xf32>
      %c0_13 = arith.constant 0 : index
      %c0_14 = arith.constant 0 : index
      %30 = vector.load %arg9[%c0_13, %c0_14] : memref<1x128xf32, #tpu.memory_space<vmem>>, vector<1x128xf32>
      tpu.vector_store %arg9[%c0_13, %c0_14], %29 {strides = array<i32>} : memref<1x128xf32, #tpu.memory_space<vmem>>, vector<1x128xf32>,
      %c0_15 = arith.constant 0 : index
      %c0_16 = arith.constant 0 : index
      %31 = vector.load %arg10[%c0_15, %c0_16] : memref<1x128xf32, #tpu.memory_space<vmem>>, vector<1x128xf32>
      %32 = arith.mulf %21, %21 : vector<8x128xf32>
      %cst_17 = arith.constant dense<0.000000e+00> : vector<128xf32>
      %33 = vector.multi_reduction <add>, %32, %cst_17 [0] : vector<8x128xf32> to vector<128xf32>
      %34 = vector.shape_cast %33 : vector<128xf32> to vector<1x128xf32>
      %35 = arith.addf %31, %34 : vector<1x128xf32>
      %c0_18 = arith.constant 0 : index
      %c0_19 = arith.constant 0 : index
      %36 = vector.load %arg10[%c0_18, %c0_19] : memref<1x128xf32, #tpu.memory_space<vmem>>, vector<1x128xf32>
      tpu.vector_store %arg10[%c0_18, %c0_19], %35 {strides = array<i32>} : memref<1x128xf32, #tpu.memory_space<vmem>>, vector<1x128xf32>,
    } else {
    }
    %c4_i32_0 = arith.constant 4 : i32
    %3 = arith.cmpi eq, %arg0, %c4_i32_0 : i32
    %4 = arith.extui %3 : i1 to i32
    %c0_i32_1 = arith.constant 0 : i32
    %5 = arith.cmpi ne, %4, %c0_i32_1 : i32
    scf.if %5 {
      %c0 = arith.constant 0 : index
      %c0_2 = arith.constant 0 : index
      %6 = vector.load %arg9[%c0, %c0_2] : memref<1x128xf32, #tpu.memory_space<vmem>>, vector<1x128xf32>
      %cst = arith.constant 0.0333333351 : f32
      %7 = vector.broadcast %cst : f32 to vector<1x128xf32>
      %8 = arith.mulf %6, %7 : vector<1x128xf32>
      %c0_3 = arith.constant 0 : index
      %c0_4 = arith.constant 0 : index
      %9 = vector.load %arg10[%c0_3, %c0_4] : memref<1x128xf32, #tpu.memory_space<vmem>>, vector<1x128xf32>
      %cst_5 = arith.constant 0.0333333351 : f32
      %10 = vector.broadcast %cst_5 : f32 to vector<1x128xf32>
      %11 = arith.mulf %9, %10 : vector<1x128xf32>
      %12 = arith.mulf %8, %8 : vector<1x128xf32>
      %13 = arith.subf %11, %12 : vector<1x128xf32>
      %c0_6 = arith.constant 0 : index
      %c0_7 = arith.constant 0 : index
      %14 = vector.load %arg3[%c0_6, %c0_7] : memref<1x128xf32, #tpu.memory_space<vmem>>, vector<1x128xf32>
      %cst_8 = arith.constant 9.99999974E-6 : f32
      %15 = vector.broadcast %cst_8 : f32 to vector<1x128xf32>
      %16 = arith.addf %13, %15 : vector<1x128xf32>
      %17 = math.rsqrt %16 : vector<1x128xf32>
      %18 = arith.mulf %14, %17 : vector<1x128xf32>
      %c0_9 = arith.constant 0 : index
      %c0_10 = arith.constant 0 : index
      %19 = vector.load %arg4[%c0_9, %c0_10] : memref<1x128xf32, #tpu.memory_space<vmem>>, vector<1x128xf32>
      %20 = arith.mulf %8, %18 : vector<1x128xf32>
      %21 = arith.subf %19, %20 : vector<1x128xf32>
      %c0_11 = arith.constant 0 : index
      %c0_12 = arith.constant 0 : index
      %22 = vector.load %arg5[%c0_11, %c0_12] : memref<128x2xf32, #tpu.memory_space<vmem>>, vector<128x2xf32>
      %c0_13 = arith.constant 0 : index
      %c0_14 = arith.constant 0 : index
      %23 = vector.load %arg6[%c0_13, %c0_14] : memref<1x2xf32, #tpu.memory_space<vmem>>, vector<1x2xf32>
      %c0_15 = arith.constant 0 : index
      %c0_16 = arith.constant 0 : index
      %24 = vector.load %arg8[%c0_15, %c0_16] : memref<32x128xf32, #tpu.memory_space<vmem>>, vector<8x128xf32>
      %25 = vector.broadcast %18 : vector<1x128xf32> to vector<8x128xf32>
      %26 = arith.mulf %24, %25 : vector<8x128xf32>
      %27 = vector.broadcast %21 : vector<1x128xf32> to vector<8x128xf32>
      %28 = arith.addf %26, %27 : vector<8x128xf32>
      %cst_17 = arith.constant 0.000000e+00 : f32
      %29 = vector.broadcast %cst_17 : f32 to vector<8x128xf32>
      %30 = arith.maximumf %28, %29 : vector<8x128xf32>
      %cst_18 = arith.constant dense<0.000000e+00> : vector<8x2xf32>
      %31 = tpu.matmul %30, %22, %cst_18 {dimension_numbers = #tpu.dot_dimension_numbers<[1], [0], [0], [1], [0, 0, 1, 1], [], []>} : vector<8x128xf32>, vector<128x2xf32>, vector<8x2xf32> -> vector<8x2xf32>
      %32 = vector.broadcast %23 : vector<1x2xf32> to vector<8x2xf32>
      %33 = arith.addf %31, %32 : vector<8x2xf32>
      %34 = vector.extract_strided_slice %33 {offsets = [0, 1], sizes = [8, 1], strides = [1, 1]} : vector<8x2xf32> to vector<8x1xf32>
      %35 = vector.extract_strided_slice %33 {offsets = [0, 0], sizes = [8, 1], strides = [1, 1]} : vector<8x2xf32> to vector<8x1xf32>
      %36 = arith.subf %34, %35 : vector<8x1xf32>
      %cst_19 = arith.constant 0.000000e+00 : f32
      %37 = vector.broadcast %cst_19 : f32 to vector<8x1xf32>
      %38 = arith.maximumf %36, %37 : vector<8x1xf32>
      %39 = math.absf %36 : vector<8x1xf32>
      %cst_20 = arith.constant 0.000000e+00 : f32
      %40 = vector.broadcast %cst_20 : f32 to vector<8x1xf32>
      %41 = arith.subf %40, %39 : vector<8x1xf32>
      %42 = math.exp %41 : vector<8x1xf32>
      %43 = math.log1p %42 : vector<8x1xf32>
      %44 = arith.addf %38, %43 : vector<8x1xf32>
      %45 = vector.extract_strided_slice %33 {offsets = [0, 0], sizes = [8, 1], strides = [1, 1]} : vector<8x2xf32> to vector<8x1xf32>
      %46 = arith.addf %45, %44 : vector<8x1xf32>
      %47 = vector.broadcast %46 : vector<8x1xf32> to vector<8x2xf32>
      %48 = arith.subf %33, %47 : vector<8x2xf32>
      %c0_21 = arith.constant 0 : index
      %c0_22 = arith.constant 0 : index
      %49 = vector.load %arg7[%c0_21, %c0_22] : memref<32x2xf32, #tpu.memory_space<vmem>>, vector<8x2xf32>
      tpu.vector_store %arg7[%c0_21, %c0_22], %48 {strides = array<i32>} : memref<32x2xf32, #tpu.memory_space<vmem>>, vector<8x2xf32>,
      %c8 = arith.constant 8 : index
      %c0_23 = arith.constant 0 : index
      %50 = vector.load %arg8[%c8, %c0_23] : memref<32x128xf32, #tpu.memory_space<vmem>>, vector<8x128xf32>
      %51 = vector.broadcast %18 : vector<1x128xf32> to vector<8x128xf32>
      %52 = arith.mulf %50, %51 : vector<8x128xf32>
      %53 = vector.broadcast %21 : vector<1x128xf32> to vector<8x128xf32>
      %54 = arith.addf %52, %53 : vector<8x128xf32>
      %cst_24 = arith.constant 0.000000e+00 : f32
      %55 = vector.broadcast %cst_24 : f32 to vector<8x128xf32>
      %56 = arith.maximumf %54, %55 : vector<8x128xf32>
      %cst_25 = arith.constant dense<0.000000e+00> : vector<8x2xf32>
      %57 = tpu.matmul %56, %22, %cst_25 {dimension_numbers = #tpu.dot_dimension_numbers<[1], [0], [0], [1], [0, 0, 1, 1], [], []>} : vector<8x128xf32>, vector<128x2xf32>, vector<8x2xf32> -> vector<8x2xf32>
      %58 = vector.broadcast %23 : vector<1x2xf32> to vector<8x2xf32>
      %59 = arith.addf %57, %58 : vector<8x2xf32>
      %60 = vector.extract_strided_slice %59 {offsets = [0, 1], sizes = [8, 1], strides = [1, 1]} : vector<8x2xf32> to vector<8x1xf32>
      %61 = vector.extract_strided_slice %59 {offsets = [0, 0], sizes = [8, 1], strides = [1, 1]} : vector<8x2xf32> to vector<8x1xf32>
      %62 = arith.subf %60, %61 : vector<8x1xf32>
      %cst_26 = arith.constant 0.000000e+00 : f32
      %63 = vector.broadcast %cst_26 : f32 to vector<8x1xf32>
      %64 = arith.maximumf %62, %63 : vector<8x1xf32>
      %65 = math.absf %62 : vector<8x1xf32>
      %cst_27 = arith.constant 0.000000e+00 : f32
      %66 = vector.broadcast %cst_27 : f32 to vector<8x1xf32>
      %67 = arith.subf %66, %65 : vector<8x1xf32>
      %68 = math.exp %67 : vector<8x1xf32>
      %69 = math.log1p %68 : vector<8x1xf32>
      %70 = arith.addf %64, %69 : vector<8x1xf32>
      %71 = vector.extract_strided_slice %59 {offsets = [0, 0], sizes = [8, 1], strides = [1, 1]} : vector<8x2xf32> to vector<8x1xf32>
      %72 = arith.addf %71, %70 : vector<8x1xf32>
      %73 = vector.broadcast %72 : vector<8x1xf32> to vector<8x2xf32>
      %74 = arith.subf %59, %73 : vector<8x2xf32>
      %c8_28 = arith.constant 8 : index
      %c0_29 = arith.constant 0 : index
      %75 = vector.load %arg7[%c8_28, %c0_29] : memref<32x2xf32, #tpu.memory_space<vmem>>, vector<8x2xf32>
      tpu.vector_store %arg7[%c8_28, %c0_29], %74 {strides = array<i32>} : memref<32x2xf32, #tpu.memory_space<vmem>>, vector<8x2xf32>,
      %c16 = arith.constant 16 : index
      %c0_30 = arith.constant 0 : index
      %76 = vector.load %arg8[%c16, %c0_30] : memref<32x128xf32, #tpu.memory_space<vmem>>, vector<8x128xf32>
      %77 = vector.broadcast %18 : vector<1x128xf32> to vector<8x128xf32>
      %78 = arith.mulf %76, %77 : vector<8x128xf32>
      %79 = vector.broadcast %21 : vector<1x128xf32> to vector<8x128xf32>
      %80 = arith.addf %78, %79 : vector<8x128xf32>
      %cst_31 = arith.constant 0.000000e+00 : f32
      %81 = vector.broadcast %cst_31 : f32 to vector<8x128xf32>
      %82 = arith.maximumf %80, %81 : vector<8x128xf32>
      %cst_32 = arith.constant dense<0.000000e+00> : vector<8x2xf32>
      %83 = tpu.matmul %82, %22, %cst_32 {dimension_numbers = #tpu.dot_dimension_numbers<[1], [0], [0], [1], [0, 0, 1, 1], [], []>} : vector<8x128xf32>, vector<128x2xf32>, vector<8x2xf32> -> vector<8x2xf32>
      %84 = vector.broadcast %23 : vector<1x2xf32> to vector<8x2xf32>
      %85 = arith.addf %83, %84 : vector<8x2xf32>
      %86 = vector.extract_strided_slice %85 {offsets = [0, 1], sizes = [8, 1], strides = [1, 1]} : vector<8x2xf32> to vector<8x1xf32>
      %87 = vector.extract_strided_slice %85 {offsets = [0, 0], sizes = [8, 1], strides = [1, 1]} : vector<8x2xf32> to vector<8x1xf32>
      %88 = arith.subf %86, %87 : vector<8x1xf32>
      %cst_33 = arith.constant 0.000000e+00 : f32
      %89 = vector.broadcast %cst_33 : f32 to vector<8x1xf32>
      %90 = arith.maximumf %88, %89 : vector<8x1xf32>
      %91 = math.absf %88 : vector<8x1xf32>
      %cst_34 = arith.constant 0.000000e+00 : f32
      %92 = vector.broadcast %cst_34 : f32 to vector<8x1xf32>
      %93 = arith.subf %92, %91 : vector<8x1xf32>
      %94 = math.exp %93 : vector<8x1xf32>
      %95 = math.log1p %94 : vector<8x1xf32>
      %96 = arith.addf %90, %95 : vector<8x1xf32>
      %97 = vector.extract_strided_slice %85 {offsets = [0, 0], sizes = [8, 1], strides = [1, 1]} : vector<8x2xf32> to vector<8x1xf32>
      %98 = arith.addf %97, %96 : vector<8x1xf32>
      %99 = vector.broadcast %98 : vector<8x1xf32> to vector<8x2xf32>
      %100 = arith.subf %85, %99 : vector<8x2xf32>
      %c16_35 = arith.constant 16 : index
      %c0_36 = arith.constant 0 : index
      %101 = vector.load %arg7[%c16_35, %c0_36] : memref<32x2xf32, #tpu.memory_space<vmem>>, vector<8x2xf32>
      tpu.vector_store %arg7[%c16_35, %c0_36], %100 {strides = array<i32>} : memref<32x2xf32, #tpu.memory_space<vmem>>, vector<8x2xf32>,
      %c24 = arith.constant 24 : index
      %c0_37 = arith.constant 0 : index
      %102 = vector.load %arg8[%c24, %c0_37] : memref<32x128xf32, #tpu.memory_space<vmem>>, vector<8x128xf32>
      %103 = vector.broadcast %18 : vector<1x128xf32> to vector<8x128xf32>
      %104 = arith.mulf %102, %103 : vector<8x128xf32>
      %105 = vector.broadcast %21 : vector<1x128xf32> to vector<8x128xf32>
      %106 = arith.addf %104, %105 : vector<8x128xf32>
      %cst_38 = arith.constant 0.000000e+00 : f32
      %107 = vector.broadcast %cst_38 : f32 to vector<8x128xf32>
      %108 = arith.maximumf %106, %107 : vector<8x128xf32>
      %cst_39 = arith.constant dense<0.000000e+00> : vector<8x2xf32>
      %109 = tpu.matmul %108, %22, %cst_39 {dimension_numbers = #tpu.dot_dimension_numbers<[1], [0], [0], [1], [0, 0, 1, 1], [], []>} : vector<8x128xf32>, vector<128x2xf32>, vector<8x2xf32> -> vector<8x2xf32>
      %110 = vector.broadcast %23 : vector<1x2xf32> to vector<8x2xf32>
      %111 = arith.addf %109, %110 : vector<8x2xf32>
      %112 = vector.extract_strided_slice %111 {offsets = [0, 1], sizes = [8, 1], strides = [1, 1]} : vector<8x2xf32> to vector<8x1xf32>
      %113 = vector.extract_strided_slice %111 {offsets = [0, 0], sizes = [8, 1], strides = [1, 1]} : vector<8x2xf32> to vector<8x1xf32>
      %114 = arith.subf %112, %113 : vector<8x1xf32>
      %cst_40 = arith.constant 0.000000e+00 : f32
      %115 = vector.broadcast %cst_40 : f32 to vector<8x1xf32>
      %116 = arith.maximumf %114, %115 : vector<8x1xf32>
      %117 = math.absf %114 : vector<8x1xf32>
      %cst_41 = arith.constant 0.000000e+00 : f32
      %118 = vector.broadcast %cst_41 : f32 to vector<8x1xf32>
      %119 = arith.subf %118, %117 : vector<8x1xf32>
      %120 = math.exp %119 : vector<8x1xf32>
      %121 = math.log1p %120 : vector<8x1xf32>
      %122 = arith.addf %116, %121 : vector<8x1xf32>
      %123 = vector.extract_strided_slice %111 {offsets = [0, 0], sizes = [8, 1], strides = [1, 1]} : vector<8x2xf32> to vector<8x1xf32>
      %124 = arith.addf %123, %122 : vector<8x1xf32>
      %125 = vector.broadcast %124 : vector<8x1xf32> to vector<8x2xf32>
      %126 = arith.subf %111, %125 : vector<8x2xf32>
      %c24_42 = arith.constant 24 : index
      %c0_43 = arith.constant 0 : index
      %127 = vector.load %arg7[%c24_42, %c0_43] : memref<32x2xf32, #tpu.memory_space<vmem>>, vector<8x2xf32>
      tpu.vector_store %arg7[%c24_42, %c0_43], %126 {strides = array<i32>} : memref<32x2xf32, #tpu.memory_space<vmem>>, vector<8x2xf32>,
    } else {
    }
    return
  }
  func.func @transform_0(%arg0: i32) -> (i32, i32) {
    %c3_i32 = arith.constant 3 : i32
    %0 = arith.minsi %arg0, %c3_i32 : i32
    %c0_i32 = arith.constant 0 : i32
    %c0_i32_0 = arith.constant 0 : i32
    return %0, %c0_i32 : i32, i32
  }
  func.func @transform_1(%arg0: i32) -> (i32, i32) {
    %c0_i32 = arith.constant 0 : i32
    %c0_i32_0 = arith.constant 0 : i32
    %c0_i32_1 = arith.constant 0 : i32
    return %c0_i32, %c0_i32_0 : i32, i32
  }
  func.func @transform_2(%arg0: i32) -> (i32, i32) {
    %c0_i32 = arith.constant 0 : i32
    %c0_i32_0 = arith.constant 0 : i32
    %c0_i32_1 = arith.constant 0 : i32
    return %c0_i32, %c0_i32_0 : i32, i32
  }
  func.func @transform_3(%arg0: i32) -> (i32, i32) {
    %c0_i32 = arith.constant 0 : i32
    %c0_i32_0 = arith.constant 0 : i32
    %c0_i32_1 = arith.constant 0 : i32
    return %c0_i32, %c0_i32_0 : i32, i32
  }
  func.func @transform_4(%arg0: i32) -> (i32, i32) {
    %c0_i32 = arith.constant 0 : i32
    %c0_i32_0 = arith.constant 0 : i32
    %c0_i32_1 = arith.constant 0 : i32
    return %c0_i32, %c0_i32_0 : i32, i32
  }
  func.func @transform_5(%arg0: i32) -> (i32, i32) {
    %c0_i32 = arith.constant 0 : i32
    %c0_i32_0 = arith.constant 0 : i32
    %c0_i32_1 = arith.constant 0 : i32
    return %c0_i32, %c0_i32_0 : i32, i32
  }
  func.func @transform_6(%arg0: i32) -> (i32, i32) {
    %c0_i32 = arith.constant 0 : i32
    %c0_i32_0 = arith.constant 0 : i32
    %c0_i32_1 = arith.constant 0 : i32
    return %c0_i32, %c0_i32_0 : i32, i32
  }
}

</mosaic_0001>

<llo_original>
// kernel: mlp_domain_classifier.1
$region0: #{mlp_domain_classifier.1}
  #allocation0 [shape = 'u32[]', space=smem, size = 0x4, offset = 0x4, fixed_abs, tag = 'smem constant byte address 0x4 - core index']
  #allocation1 [shape = 'u32[72,128]{1,0:T(1,128)}', space=vmem, size = 0x9000, scoped, tag = 'internal scratch']
  #allocation2 [shape = 'f32[32,128]{1,0:T(8,128)}', space=vmem, size = 0x4000, scoped, tag = 'scratch operand']
  #allocation3 [shape = 'f32[1,128]{1,0:T(1,128)}', space=vmem, size = 0x200, scoped, tag = 'scratch operand']
  #allocation4 [shape = 'f32[1,128]{1,0:T(1,128)}', space=vmem, size = 0x200, scoped, tag = 'scratch operand']
  %s0 = inlined_call_operand.vmem [shape: f32[30,768], index: 0, kind: input, shape index: {}]
  %s1 = inlined_call_operand.vmem [shape: f32[768,128], index: 1, kind: input, shape index: {}]
  %s2 = inlined_call_operand.vmem [shape: f32[1,128], index: 2, kind: input, shape index: {}]
  %s3 = inlined_call_operand.vmem [shape: f32[1,128], index: 3, kind: input, shape index: {}]
  %s4 = inlined_call_operand.vmem [shape: f32[128,2], index: 4, kind: input, shape index: {}]
  %s5 = inlined_call_operand.vmem [shape: f32[1,2], index: 5, kind: input, shape index: {}]
  %s6 = inlined_call_operand.vmem [shape: f32[32,2], index: 6, kind: output, shape index: {}]
  %s7 = sld [smem:[#allocation0]]
  $region69: #{mlp_domain_classifier.1} parent=0
    _
  %s9 = ssub.s32 1, %s7
  %s10 = scalar_select 0, %s9, %s7
  loop: start=0, step=1, limit=7
  $region2: #{mlp_domain_classifier.1} parent=0 // loop_pre_header
    _
  $region3: #{mlp_domain_classifier.1} parent=0 // loop_header
    %s12 = sphi 0, %s16
    %p13 = scmp.ge.s32.totalorder %s12, 7
    %s26 = sphi 0, %s28
    %s29 = sphi 0, %s26
    %s30 = sphi 0, %s29
    %s46 = sphi 0, %s30
    %s50 = sphi 0, %s50
    %s52 = sphi 0, %s50
    %s53 = sphi 0, %s52
    %s67 = sphi 0, %s53
    %s71 = sphi 0, %s71
    %s73 = sphi 0, %s71
    %s74 = sphi 0, %s73
    %s88 = sphi 0, %s74
    %s92 = sphi 0, %s92
    %s94 = sphi 0, %s92
    %s95 = sphi 0, %s94
    %s109 = sphi 0, %s95
    %s113 = sphi 0, %s113
    %s115 = sphi 0, %s113
    %s116 = sphi 0, %s115
    %s130 = sphi 0, %s116
    %s134 = sphi 0, %s134
    %s136 = sphi 0, %s134
    %s137 = sphi 0, %s136
    %s151 = sphi 0, %s137
    %s155 = sphi 0, %s155
    %s157 = sphi 0, %s155
    %s158 = sphi 0, %s157
    %s172 = sphi 0, %s158
  $region4: #{mlp_domain_classifier.1} parent=0 // loop_header_branch
    %15 = sbr.rel (%p13) target = $region8
  $region5: #{mlp_domain_classifier.1} parent=0 // loop_body
    %s17 = ssub.s32 %s12, 1
    %s18 = ssub.s32 %s12, 2
    %s19 = sadd.s32 %s12, 1
    %p20 = scmp.lt.s32.totalorder %s12, 3
    %s21 = scalar_select %p20, %s12, 3
    %p22 = scmp.lt.s32.totalorder %s19, 3
    %s23 = scalar_select %p22, %s19, 3
    %s24 = ssub.s32 %s21, %s23
    %p25 = scmp.eq.s32.totalorder %s24, 0
    %s27 = sadd.s32 %s26, 1
    %s28 = scalar_select %p25, %s26, %s27
    %p31 = pneg %p25
    %p32 = scmp.eq.s32.totalorder %s12, 4
    %p33 = por %p31, %p32
    %p34 = scmp.ne.s32.totalorder %s26, %s29
    %p35 = scmp.eq.s32.totalorder %s12, 0
    %p36 = por %p34, %p35
    %p37 = scmp.ne.s32.totalorder %s26, %s29
    %p38 = scmp.eq.s32.totalorder %s17, 4
    %p39 = por %p37, %p38
    %p40 = scmp.ne.s32.totalorder %s29, %s30
    %p41 = scmp.eq.s32.totalorder %s17, 0
    %p42 = por %p40, %p41
    %p43 = scmp.ne.s32.totalorder %s29, %s30
    %p44 = scmp.eq.s32.totalorder %s18, 4
    %p45 = por %p43, %p44
    %p47 = scmp.ne.s32.totalorder %s30, %s46
    %p48 = scmp.eq.s32.totalorder %s18, 0
    %p49 = por %p47, %p48
    %s51 = sadd.s32 %s50, 1
    %p54 = scmp.eq.s32.totalorder %s12, 4
    %p55 = scmp.ne.s32.totalorder %s50, %s52
    %p56 = scmp.eq.s32.totalorder %s12, 0
    %p57 = por %p55, %p56
    %p58 = scmp.ne.s32.totalorder %s50, %s52
    %p59 = scmp.eq.s32.totalorder %s17, 4
    %p60 = por %p58, %p59
    %p61 = scmp.ne.s32.totalorder %s52, %s53
    %p62 = scmp.eq.s32.totalorder %s17, 0
    %p63 = por %p61, %p62
    %p64 = scmp.ne.s32.totalorder %s52, %s53
    %p65 = scmp.eq.s32.totalorder %s18, 4
    %p66 = por %p64, %p65
    %p68 = scmp.ne.s32.totalorder %s53, %s67
    %p69 = scmp.eq.s32.totalorder %s18, 0
    %p70 = por %p68, %p69
    %s72 = sadd.s32 %s71, 1
    %p75 = scmp.eq.s32.totalorder %s12, 4
    %p76 = scmp.ne.s32.totalorder %s71, %s73
    %p77 = scmp.eq.s32.totalorder %s12, 0
    %p78 = por %p76, %p77
    %p79 = scmp.ne.s32.totalorder %s71, %s73
    %p80 = scmp.eq.s32.totalorder %s17, 4
    %p81 = por %p79, %p80
    %p82 = scmp.ne.s32.totalorder %s73, %s74
    %p83 = scmp.eq.s32.totalorder %s17, 0
    %p84 = por %p82, %p83
    %p85 = scmp.ne.s32.totalorder %s73, %s74
    %p86 = scmp.eq.s32.totalorder %s18, 4
    %p87 = por %p85, %p86
    %p89 = scmp.ne.s32.totalorder %s74, %s88
    %p90 = scmp.eq.s32.totalorder %s18, 0
    %p91 = por %p89, %p90
    %s93 = sadd.s32 %s92, 1
    %p96 = scmp.eq.s32.totalorder %s12, 4
    %p97 = scmp.ne.s32.totalorder %s92, %s94
    %p98 = scmp.eq.s32.totalorder %s12, 0
    %p99 = por %p97, %p98
    %p100 = scmp.ne.s32.totalorder %s92, %s94
    %p101 = scmp.eq.s32.totalorder %s17, 4
    %p102 = por %p100, %p101
    %p103 = scmp.ne.s32.totalorder %s94, %s95
    %p104 = scmp.eq.s32.totalorder %s17, 0
    %p105 = por %p103, %p104
    %p106 = scmp.ne.s32.totalorder %s94, %s95
    %p107 = scmp.eq.s32.totalorder %s18, 4
    %p108 = por %p106, %p107
    %p110 = scmp.ne.s32.totalorder %s95, %s109
    %p111 = scmp.eq.s32.totalorder %s18, 0
    %p112 = por %p110, %p111
    %s114 = sadd.s32 %s113, 1
    %p117 = scmp.eq.s32.totalorder %s12, 4
    %p118 = scmp.ne.s32.totalorder %s113, %s115
    %p119 = scmp.eq.s32.totalorder %s12, 0
    %p120 = por %p118, %p119
    %p121 = scmp.ne.s32.totalorder %s113, %s115
    %p122 = scmp.eq.s32.totalorder %s17, 4
    %p123 = por %p121, %p122
    %p124 = scmp.ne.s32.totalorder %s115, %s116
    %p125 = scmp.eq.s32.totalorder %s17, 0
    %p126 = por %p124, %p125
    %p127 = scmp.ne.s32.totalorder %s115, %s116
    %p128 = scmp.eq.s32.totalorder %s18, 4
    %p129 = por %p127, %p128
    %p131 = scmp.ne.s32.totalorder %s116, %s130
    %p132 = scmp.eq.s32.totalorder %s18, 0
    %p133 = por %p131, %p132
    %s135 = sadd.s32 %s134, 1
    %p138 = scmp.eq.s32.totalorder %s12, 4
    %p139 = scmp.ne.s32.totalorder %s134, %s136
    %p140 = scmp.eq.s32.totalorder %s12, 0
    %p141 = por %p139, %p140
    %p142 = scmp.ne.s32.totalorder %s134, %s136
    %p143 = scmp.eq.s32.totalorder %s17, 4
    %p144 = por %p142, %p143
    %p145 = scmp.ne.s32.totalorder %s136, %s137
    %p146 = scmp.eq.s32.totalorder %s17, 0
    %p147 = por %p145, %p146
    %p148 = scmp.ne.s32.totalorder %s136, %s137
    %p149 = scmp.eq.s32.totalorder %s18, 4
    %p150 = por %p148, %p149
    %p152 = scmp.ne.s32.totalorder %s137, %s151
    %p153 = scmp.eq.s32.totalorder %s18, 0
    %p154 = por %p152, %p153
    %s156 = sadd.s32 %s155, 1
    %p159 = scmp.eq.s32.totalorder %s12, 4
    %p160 = scmp.ne.s32.totalorder %s155, %s157
    %p161 = scmp.eq.s32.totalorder %s12, 0
    %p162 = por %p160, %p161
    %p163 = scmp.ne.s32.totalorder %s155, %s157
    %p164 = scmp.eq.s32.totalorder %s17, 4
    %p165 = por %p163, %p164
    %p166 = scmp.ne.s32.totalorder %s157, %s158
    %p167 = scmp.eq.s32.totalorder %s17, 0
    %p168 = por %p166, %p167
    %p169 = scmp.ne.s32.totalorder %s157, %s158
    %p170 = scmp.eq.s32.totalorder %s18, 4
    %p171 = por %p169, %p170
    %p173 = scmp.ne.s32.totalorder %s158, %s172
    %p174 = scmp.eq.s32.totalorder %s18, 0
    %p175 = por %p173, %p174
    %p176 = scmp.le.s32.totalorder 1, %s12
    %p177 = scmp.lt.s32.totalorder %s12, 6
    %p178 = pnand %p176, %p177
    %p179 = pneg %p178
    // Predicated region
    $region9: #{mlp_domain_classifier.1} parent=5 // pred_check
      _
    $region10: #{mlp_domain_classifier.1} parent=5 // pred_check_branch
      %181 = sbr.rel (%p178) target = $region12
    $region11: #{mlp_domain_classifier.1} parent=5 // pred_region
      %s182 = ssub.s32 %s12, 1
      // Predicated region
      $region13: #{mlp_domain_classifier.1} parent=11 // pred_check
        %p183 = pneg %p63
      $region14: #{mlp_domain_classifier.1} parent=11 // pred_check_branch
        %185 = sbr.rel (%p183) target = $region16
      $region15: #{mlp_domain_classifier.1} parent=11 // pred_region
        _
      $region16: #{mlp_domain_classifier.1} parent=11 // pred_fallthru
        _
      // Predicated region
      $region17: #{mlp_domain_classifier.1} parent=11 // pred_check
        %p186 = pneg %p84
      $region18: #{mlp_domain_classifier.1} parent=11 // pred_check_branch
        %188 = sbr.rel (%p186) target = $region20
      $region19: #{mlp_domain_classifier.1} parent=11 // pred_region
        _
      $region20: #{mlp_domain_classifier.1} parent=11 // pred_fallthru
        _
      // Predicated region
      $region21: #{mlp_domain_classifier.1} parent=11 // pred_check
        %p189 = pneg %p105
      $region22: #{mlp_domain_classifier.1} parent=11 // pred_check_branch
        %191 = sbr.rel (%p189) target = $region24
      $region23: #{mlp_domain_classifier.1} parent=11 // pred_region
        _
      $region24: #{mlp_domain_classifier.1} parent=11 // pred_fallthru
        _
      // Predicated region
      $region25: #{mlp_domain_classifier.1} parent=11 // pred_check
        %p192 = pneg %p126
      $region26: #{mlp_domain_classifier.1} parent=11 // pred_check_branch
        %194 = sbr.rel (%p192) target = $region28
      $region27: #{mlp_domain_classifier.1} parent=11 // pred_region
        _
      $region28: #{mlp_domain_classifier.1} parent=11 // pred_fallthru
        _
      // Predicated region
      $region29: #{mlp_domain_classifier.1} parent=11 // pred_check
        %p195 = pneg %p147
      $region30: #{mlp_domain_classifier.1} parent=11 // pred_check_branch
        %197 = sbr.rel (%p195) target = $region32
      $region31: #{mlp_domain_classifier.1} parent=11 // pred_region
        _
      $region32: #{mlp_domain_classifier.1} parent=11 // pred_fallthru
        _
    $region12: #{mlp_domain_classifier.1} parent=5 // pred_fallthru
      _
    %p198 = scmp.lt.s32.totalorder %s12, 5
    // Predicated region
    $region33: #{mlp_domain_classifier.1} parent=5 // pred_check
      %p199 = pneg %p198
    $region34: #{mlp_domain_classifier.1} parent=5 // pred_check_branch
      %201 = sbr.rel (%p199) target = $region36
    $region35: #{mlp_domain_classifier.1} parent=5 // pred_region
      // Predicated region
      $region37: #{mlp_domain_classifier.1} parent=35 // pred_check
        %p202 = pneg %p36
      $region38: #{mlp_domain_classifier.1} parent=35 // pred_check_branch
        %204 = sbr.rel (%p202) target = $region40
      $region39: #{mlp_domain_classifier.1} parent=35 // pred_region
        %p205 = scmp.lt.s32.totalorder %s12, 3
        %s206 = scalar_select %p205, %s12, 3
        %p207 = scmp.lt.s32.totalorder %s206, 3
        %s208 = scalar_select %p207, %s206, 3
        %s209 = smul.addr %s208, 6
        %s210 = smul.addr %s209, 8
        %s211 = scalar_lea.vmem %s0, %s210
        %p212 = scmp.lt.s32.totalorder %s12, 3
        %s213 = scalar_select %p212, %s12, 3
      $region40: #{mlp_domain_classifier.1} parent=35 // pred_fallthru
        _
    $region36: #{mlp_domain_classifier.1} parent=5 // pred_fallthru
      _
    %p214 = scmp.le.s32.totalorder 1, %s12
    %p215 = scmp.lt.s32.totalorder %s12, 6
    %p216 = pnand %p214, %p215
    %p217 = pneg %p216
    // Predicated region
    $region41: #{mlp_domain_classifier.1} parent=5 // pred_check
      _
    $region42: #{mlp_domain_classifier.1} parent=5 // pred_check_branch
      %219 = sbr.rel (%p216) target = $region44
    $region43: #{mlp_domain_classifier.1} parent=5 // pred_region
      %s220 = ssub.s32 %s12, 1
      %p221 = scmp.lt.s32.totalorder %s17, 3
      %s222 = scalar_select %p221, %s17, 3
      %p223 = scmp.lt.s32.totalorder %s222, 3
      %s224 = scalar_select %p223, %s222, 3
      %s225 = smul.addr %s224, 6
      %s226 = smul.addr %s225, 8
      %s227 = scalar_lea.vmem %s0, %s226
      %p228 = pneg %p42
      %p229 = pneg %p39
      %p230 = pneg %p63
      %p231 = pneg %p60
      %p232 = pneg %p84
      %p233 = pneg %p81
      %p234 = pneg %p105
      %p235 = pneg %p102
      %p236 = pneg %p126
      %p237 = pneg %p123
      %p238 = pneg %p147
      %p239 = pneg %p144
      %p240 = pneg %p168
      %p241 = pneg %p165
      %p242 = scmp.lt.s32.totalorder %s17, 3
      %s243 = scalar_select %p242, %s17, 3
      %p244 = scmp.lt.s32.totalorder %s243, 3
      %s245 = scalar_select %p244, %s243, 3
      %s246 = smul.addr %s245, 6
      %s247 = smul.addr %s246, 8
      %s248 = scalar_lea.vmem %s0, %s247
      %p249 = scmp.lt.s32.totalorder %s17, 3
      %s250 = scalar_select %p249, %s17, 3
      %p251 = scmp.lt.s32.totalorder %s17, 4
      // Predicated region
      $region45: #{mlp_domain_classifier.1} parent=43 // pred_check
        %p252 = pneg %p251
      $region46: #{mlp_domain_classifier.1} parent=43 // pred_check_branch
        %254 = sbr.rel (%p252) target = $region48
      $region47: #{mlp_domain_classifier.1} parent=43 // pred_region
        %p255 = scmp.eq.s32.totalorder %s17, 0
        // Predicated region
        $region49: #{mlp_domain_classifier.1} parent=47 // pred_check
          %p256 = pneg %p255
        $region50: #{mlp_domain_classifier.1} parent=47 // pred_check_branch
          %258 = sbr.rel (%p256) target = $region52
        $region51: #{mlp_domain_classifier.1} parent=47 // pred_region
          %259 = vst [vmem:[#allocation3] sm:$0x1] 0.0
          %260 = vst [vmem:[#allocation4] sm:$0x1] 0.0
        $region52: #{mlp_domain_classifier.1} parent=47 // pred_fallthru
          _
        %v261 = vld [vmem:[%s248] sm:$0xff]
        %v262 = vld [vmem:[%s248 + $0x8] sm:$0xff]
        %v263 = vld [vmem:[%s248 + $0x10] sm:$0xff]
        %v264 = vld [vmem:[%s248 + $0x18] sm:$0xff]
        %v265 = vld [vmem:[%s248 + $0x20] sm:$0xff]
        %v266 = vld [vmem:[%s248 + $0x28] sm:$0xff]
        %v267 = vld [vmem:[%s1] sm:$0xff]
        %v268 = vld [vmem:[%s1 + $0x8] sm:$0xff]
        %v269 = vld [vmem:[%s1 + $0x10] sm:$0xff]
        %v270 = vld [vmem:[%s1 + $0x18] sm:$0xff]
        %v271 = vld [vmem:[%s1 + $0x20] sm:$0xff]
        %v272 = vld [vmem:[%s1 + $0x28] sm:$0xff]
        %v273 = vld [vmem:[%s1 + $0x30] sm:$0xff]
        %v274 = vld [vmem:[%s1 + $0x38] sm:$0xff]
        %v275 = vld [vmem:[%s1 + $0x40] sm:$0xff]
        %v276 = vld [vmem:[%s1 + $0x48] sm:$0xff]
        %v277 = vld [vmem:[%s1 + $0x50] sm:$0xff]
        %v278 = vld [vmem:[%s1 + $0x58] sm:$0xff]
        %v279 = vld [vmem:[%s1 + $0x60] sm:$0xff]
        %v280 = vld [vmem:[%s1 + $0x68] sm:$0xff]
        %v281 = vld [vmem:[%s1 + $0x70] sm:$0xff]
        %v282 = vld [vmem:[%s1 + $0x78] sm:$0xff]
        %v283 = vld [vmem:[%s1 + $0x80] sm:$0xff]
        %v284 = vld [vmem:[%s1 + $0x88] sm:$0xff]
        %v285 = vld [vmem:[%s1 + $0x90] sm:$0xff]
        %v286 = vld [vmem:[%s1 + $0x98] sm:$0xff]
        %v287 = vld [vmem:[%s1 + $0xa0] sm:$0xff]
        %v288 = vld [vmem:[%s1 + $0xa8] sm:$0xff]
        %v289 = vld [vmem:[%s1 + $0xb0] sm:$0xff]
        %v290 = vld [vmem:[%s1 + $0xb8] sm:$0xff]
        %v291 = vld [vmem:[%s1 + $0xc0] sm:$0xff]
        %v292 = vld [vmem:[%s1 + $0xc8] sm:$0xff]
        %v293 = vld [vmem:[%s1 + $0xd0] sm:$0xff]
        %v294 = vld [vmem:[%s1 + $0xd8] sm:$0xff]
        %v295 = vld [vmem:[%s1 + $0xe0] sm:$0xff]
        %v296 = vld [vmem:[%s1 + $0xe8] sm:$0xff]
        %v297 = vld [vmem:[%s1 + $0xf0] sm:$0xff]
        %v298 = vld [vmem:[%s1 + $0xf8] sm:$0xff]
        %v299 = vld [vmem:[%s1 + $0x100] sm:$0xff]
        %v300 = vld [vmem:[%s1 + $0x108] sm:$0xff]
        %v301 = vld [vmem:[%s1 + $0x110] sm:$0xff]
        %v302 = vld [vmem:[%s1 + $0x118] sm:$0xff]
        %v303 = vld [vmem:[%s1 + $0x120] sm:$0xff]
        %v304 = vld [vmem:[%s1 + $0x128] sm:$0xff]
        %v305 = vld [vmem:[%s1 + $0x130] sm:$0xff]
        %v306 = vld [vmem:[%s1 + $0x138] sm:$0xff]
        %v307 = vld [vmem:[%s1 + $0x140] sm:$0xff]
        %v308 = vld [vmem:[%s1 + $0x148] sm:$0xff]
        %v309 = vld [vmem:[%s1 + $0x150] sm:$0xff]
        %v310 = vld [vmem:[%s1 + $0x158] sm:$0xff]
        %v311 = vld [vmem:[%s1 + $0x160] sm:$0xff]
        %v312 = vld [vmem:[%s1 + $0x168] sm:$0xff]
        %v313 = vld [vmem:[%s1 + $0x170] sm:$0xff]
        %v314 = vld [vmem:[%s1 + $0x178] sm:$0xff]
        %v315 = vld [vmem:[%s1 + $0x180] sm:$0xff]
        %v316 = vld [vmem:[%s1 + $0x188] sm:$0xff]
        %v317 = vld [vmem:[%s1 + $0x190] sm:$0xff]
        %v318 = vld [vmem:[%s1 + $0x198] sm:$0xff]
        %v319 = vld [vmem:[%s1 + $0x1a0] sm:$0xff]
        %v320 = vld [vmem:[%s1 + $0x1a8] sm:$0xff]
        %v321 = vld [vmem:[%s1 + $0x1b0] sm:$0xff]
        %v322 = vld [vmem:[%s1 + $0x1b8] sm:$0xff]
        %v323 = vld [vmem:[%s1 + $0x1c0] sm:$0xff]
        %v324 = vld [vmem:[%s1 + $0x1c8] sm:$0xff]
        %v325 = vld [vmem:[%s1 + $0x1d0] sm:$0xff]
        %v326 = vld [vmem:[%s1 + $0x1d8] sm:$0xff]
        %v327 = vld [vmem:[%s1 + $0x1e0] sm:$0xff]
        %v328 = vld [vmem:[%s1 + $0x1e8] sm:$0xff]
        %v329 = vld [vmem:[%s1 + $0x1f0] sm:$0xff]
        %v330 = vld [vmem:[%s1 + $0x1f8] sm:$0xff]
        %v331 = vld [vmem:[%s1 + $0x200] sm:$0xff]
        %v332 = vld [vmem:[%s1 + $0x208] sm:$0xff]
        %v333 = vld [vmem:[%s1 + $0x210] sm:$0xff]
        %v334 = vld [vmem:[%s1 + $0x218] sm:$0xff]
        %v335 = vld [vmem:[%s1 + $0x220] sm:$0xff]
        %v336 = vld [vmem:[%s1 + $0x228] sm:$0xff]
        %v337 = vld [vmem:[%s1 + $0x230] sm:$0xff]
        %v338 = vld [vmem:[%s1 + $0x238] sm:$0xff]
        %v339 = vld [vmem:[%s1 + $0x240] sm:$0xff]
        %v340 = vld [vmem:[%s1 + $0x248] sm:$0xff]
        %v341 = vld [vmem:[%s1 + $0x250] sm:$0xff]
        %v342 = vld [vmem:[%s1 + $0x258] sm:$0xff]
        %v343 = vld [vmem:[%s1 + $0x260] sm:$0xff]
        %v344 = vld [vmem:[%s1 + $0x268] sm:$0xff]
        %v345 = vld [vmem:[%s1 + $0x270] sm:$0xff]
        %v346 = vld [vmem:[%s1 + $0x278] sm:$0xff]
        %v347 = vld [vmem:[%s1 + $0x280] sm:$0xff]
        %v348 = vld [vmem:[%s1 + $0x288] sm:$0xff]
        %v349 = vld [vmem:[%s1 + $0x290] sm:$0xff]
        %v350 = vld [vmem:[%s1 + $0x298] sm:$0xff]
        %v351 = vld [vmem:[%s1 + $0x2a0] sm:$0xff]
        %v352 = vld [vmem:[%s1 + $0x2a8] sm:$0xff]
        %v353 = vld [vmem:[%s1 + $0x2b0] sm:$0xff]
        %v354 = vld [vmem:[%s1 + $0x2b8] sm:$0xff]
        %v355 = vld [vmem:[%s1 + $0x2c0] sm:$0xff]
        %v356 = vld [vmem:[%s1 + $0x2c8] sm:$0xff]
        %v357 = vld [vmem:[%s1 + $0x2d0] sm:$0xff]
        %v358 = vld [vmem:[%s1 + $0x2d8] sm:$0xff]
        %v359 = vld [vmem:[%s1 + $0x2e0] sm:$0xff]
        %v360 = vld [vmem:[%s1 + $0x2e8] sm:$0xff]
        %v361 = vld [vmem:[%s1 + $0x2f0] sm:$0xff]
        %v362 = vld [vmem:[%s1 + $0x2f8] sm:$0xff]
        %363 = vmatpush.msra.mxu0 %v282
        %364 = vmatpush.msra.mxu0 %v281
        %365 = vmatpush.msra.mxu0 %v280
        %366 = vmatpush.msra.mxu0 %v279
        %367 = vmatpush.msra.mxu0 %v278
        %368 = vmatpush.msra.mxu0 %v277
        %369 = vmatpush.msra.mxu0 %v276
        %370 = vmatpush.msra.mxu0 %v275
        %371 = vmatpush.msra.mxu0 %v274
        %372 = vmatpush.msra.mxu0 %v273
        %373 = vmatpush.msra.mxu0 %v272
        %374 = vmatpush.msra.mxu0 %v271
        %375 = vmatpush.msra.mxu0 %v270
        %376 = vmatpush.msra.mxu0 %v269
        %377 = vmatpush.msra.mxu0 %v268
        %378 = vmatpush.msra.mxu0 %v267
        %379 = vmatmul.f32.gmra.mxu0 %v261
        %v380 = vpop.f32.mrf.mxu0
        %v381 = vadd.f32 0.0, %v380
        %382 = vdwg.mxu0
        %383 = vmatpush.msra.mxu0 %v298
        %384 = vmatpush.msra.mxu0 %v297
        %385 = vmatpush.msra.mxu0 %v296
        %386 = vmatpush.msra.mxu0 %v295
        %387 = vmatpush.msra.mxu0 %v294
        %388 = vmatpush.msra.mxu0 %v293
        %389 = vmatpush.msra.mxu0 %v292
        %390 = vmatpush.msra.mxu0 %v291
        %391 = vmatpush.msra.mxu0 %v290
        %392 = vmatpush.msra.mxu0 %v289
        %393 = vmatpush.msra.mxu0 %v288
        %394 = vmatpush.msra.mxu0 %v287
        %395 = vmatpush.msra.mxu0 %v286
        %396 = vmatpush.msra.mxu0 %v285
        %397 = vmatpush.msra.mxu0 %v284
        %398 = vmatpush.msra.mxu0 %v283
        %399 = vmatmul.f32.gmra.mxu0 %v262
        %v400 = vpop.f32.mrf.mxu0
        %v401 = vadd.f32 %v381, %v400
        %402 = vdwg.mxu0
        %403 = vmatpush.msra.mxu0 %v314
        %404 = vmatpush.msra.mxu0 %v313
        %405 = vmatpush.msra.mxu0 %v312
        %406 = vmatpush.msra.mxu0 %v311
        %407 = vmatpush.msra.mxu0 %v310
        %408 = vmatpush.msra.mxu0 %v309
        %409 = vmatpush.msra.mxu0 %v308
        %410 = vmatpush.msra.mxu0 %v307
        %411 = vmatpush.msra.mxu0 %v306
        %412 = vmatpush.msra.mxu0 %v305
        %413 = vmatpush.msra.mxu0 %v304
        %414 = vmatpush.msra.mxu0 %v303
        %415 = vmatpush.msra.mxu0 %v302
        %416 = vmatpush.msra.mxu0 %v301
        %417 = vmatpush.msra.mxu0 %v300
        %418 = vmatpush.msra.mxu0 %v299
        %419 = vmatmul.f32.gmra.mxu0 %v263
        %v420 = vpop.f32.mrf.mxu0
        %v421 = vadd.f32 %v401, %v420
        %422 = vdwg.mxu0
        %423 = vmatpush.msra.mxu0 %v330
        %424 = vmatpush.msra.mxu0 %v329
        %425 = vmatpush.msra.mxu0 %v328
        %426 = vmatpush.msra.mxu0 %v327
        %427 = vmatpush.msra.mxu0 %v326
        %428 = vmatpush.msra.mxu0 %v325
        %429 = vmatpush.msra.mxu0 %v324
        %430 = vmatpush.msra.mxu0 %v323
        %431 = vmatpush.msra.mxu0 %v322
        %432 = vmatpush.msra.mxu0 %v321
        %433 = vmatpush.msra.mxu0 %v320
        %434 = vmatpush.msra.mxu0 %v319
        %435 = vmatpush.msra.mxu0 %v318
        %436 = vmatpush.msra.mxu0 %v317
        %437 = vmatpush.msra.mxu0 %v316
        %438 = vmatpush.msra.mxu0 %v315
        %439 = vmatmul.f32.gmra.mxu0 %v264
        %v440 = vpop.f32.mrf.mxu0
        %v441 = vadd.f32 %v421, %v440
        %442 = vdwg.mxu0
        %443 = vmatpush.msra.mxu0 %v346
        %444 = vmatpush.msra.mxu0 %v345
        %445 = vmatpush.msra.mxu0 %v344
        %446 = vmatpush.msra.mxu0 %v343
        %447 = vmatpush.msra.mxu0 %v342
        %448 = vmatpush.msra.mxu0 %v341
        %449 = vmatpush.msra.mxu0 %v340
        %450 = vmatpush.msra.mxu0 %v339
        %451 = vmatpush.msra.mxu0 %v338
        %452 = vmatpush.msra.mxu0 %v337
        %453 = vmatpush.msra.mxu0 %v336
        %454 = vmatpush.msra.mxu0 %v335
        %455 = vmatpush.msra.mxu0 %v334
        %456 = vmatpush.msra.mxu0 %v333
        %457 = vmatpush.msra.mxu0 %v332
        %458 = vmatpush.msra.mxu0 %v331
        %459 = vmatmul.f32.gmra.mxu0 %v265
        %v460 = vpop.f32.mrf.mxu0
        %v461 = vadd.f32 %v441, %v460
        %462 = vdwg.mxu0
        %463 = vmatpush.msra.mxu0 %v362
        %464 = vmatpush.msra.mxu0 %v361
        %465 = vmatpush.msra.mxu0 %v360
        %466 = vmatpush.msra.mxu0 %v359
        %467 = vmatpush.msra.mxu0 %v358
        %468 = vmatpush.msra.mxu0 %v357
        %469 = vmatpush.msra.mxu0 %v356
        %470 = vmatpush.msra.mxu0 %v355
        %471 = vmatpush.msra.mxu0 %v354
        %472 = vmatpush.msra.mxu0 %v353
        %473 = vmatpush.msra.mxu0 %v352
        %474 = vmatpush.msra.mxu0 %v351
        %475 = vmatpush.msra.mxu0 %v350
        %476 = vmatpush.msra.mxu0 %v349
        %477 = vmatpush.msra.mxu0 %v348
        %478 = vmatpush.msra.mxu0 %v347
        %479 = vmatmul.f32.gmra.mxu0 %v266
        %v480 = vpop.f32.mrf.mxu0
        %v481 = vadd.f32 %v461, %v480
        %482 = vdwg.mxu0
        %s483 = smul.u32 %s17, 8
        %v484 = vlaneseq
        %v485 = vshrl.u32 %v484, 7
        %v486 = vstv %s483
        %v487 = vadd.s32 %v486, %v485
        %vm488 = vcmp.lt.s32.totalorder %v487, 30
        %v489 = vsel %vm488, 1, 0
        %vm490 = vcmp.eq.s32.totalorder %v489, 1
        %v491 = vsel %vm490, %v481, 0.0
        %s492 = scalar_lea.vmem [#allocation2], %s483
        %493 = vst [vmem:[%s492] sm:$0xff] %v491
        %v494 = vld [vmem:[#allocation3] sm:$0x1]
        %v495 = vrot.slane %v491, 4
        %v496 = vadd.f32 %v491, %v495
        %v497 = vrot.slane %v496, 2
        %v498 = vadd.f32 %v496, %v497
        %v499 = vrot.slane %v498, 1
        %v500 = vadd.f32 %v498, %v499
        %v501 = vadd.f32 %v494, %v500
        %502 = vst [vmem:[#allocation3] sm:$0x1] %v501
        %v503 = vld [vmem:[#allocation4] sm:$0x1]
        %v504 = vmul.f32 %v491, %v491
        %v505 = vrot.slane %v504, 4
        %v506 = vadd.f32 %v504, %v505
        %v507 = vrot.slane %v506, 2
        %v508 = vadd.f32 %v506, %v507
        %v509 = vrot.slane %v508, 1
        %v510 = vadd.f32 %v508, %v509
        %v511 = vadd.f32 %v503, %v510
        %512 = vst [vmem:[#allocation4] sm:$0x1] %v511
      $region48: #{mlp_domain_classifier.1} parent=43 // pred_fallthru
        _
      %p513 = scmp.eq.s32.totalorder %s17, 4
      // Predicated region
      $region53: #{mlp_domain_classifier.1} parent=43 // pred_check
        %p514 = pneg %p513
      $region54: #{mlp_domain_classifier.1} parent=43 // pred_check_branch
        %516 = sbr.rel (%p514) target = $region56
      $region55: #{mlp_domain_classifier.1} parent=43 // pred_region
        %v517 = vld [vmem:[#allocation3] sm:$0x1]
        %v518 = vmul.f32 %v517, 0.033333335
        %v519 = vld [vmem:[#allocation4] sm:$0x1]
        %v520 = vmul.f32 %v519, 0.033333335
        %v521 = vmul.f32 %v518, %v518
        %v522 = vsub.f32 %v520, %v521
        %v523 = vld [vmem:[%s2] sm:$0x1]
        %v524 = vadd.f32 %v522, 1e-05
        %v525 = vrsqrt.pop %v524
        %v526 = vmul.f32 %v525, %v524
        %v527 = vmul.f32 %v526, %v525
        %v528 = vmul.f32 0.5, %v527
        %v529 = vsub.f32 1.5, %v528
        %v530 = vmul.f32 %v525, %v529
        %vm531 = vweird.f32 %v524
        %vm532 = vweird.f32 %v525
        %vm533 = vmor %vm531, %vm532
        %v534 = vsel %vm533, %v525, %v530
        %v535 = vmul.f32 %v523, %v534
        %v536 = vld [vmem:[%s3] sm:$0x1]
        %v537 = vmul.f32 %v518, %v535
        %v538 = vsub.f32 %v536, %v537
        %v539 = vld [vmem:[%s4] sm:$0xff]
        %v540 = vld [vmem:[%s4 + $0x8] sm:$0xff]
        %v541 = vld [vmem:[%s4 + $0x10] sm:$0xff]
        %v542 = vld [vmem:[%s4 + $0x18] sm:$0xff]
        %v543 = vld [vmem:[%s4 + $0x20] sm:$0xff]
        %v544 = vld [vmem:[%s4 + $0x28] sm:$0xff]
        %v545 = vld [vmem:[%s4 + $0x30] sm:$0xff]
        %v546 = vld [vmem:[%s4 + $0x38] sm:$0xff]
        %v547 = vld [vmem:[%s4 + $0x40] sm:$0xff]
        %v548 = vld [vmem:[%s4 + $0x48] sm:$0xff]
        %v549 = vld [vmem:[%s4 + $0x50] sm:$0xff]
        %v550 = vld [vmem:[%s4 + $0x58] sm:$0xff]
        %v551 = vld [vmem:[%s4 + $0x60] sm:$0xff]
        %v552 = vld [vmem:[%s4 + $0x68] sm:$0xff]
        %v553 = vld [vmem:[%s4 + $0x70] sm:$0xff]
        %v554 = vld [vmem:[%s4 + $0x78] sm:$0xff]
        %v555 = vld [vmem:[%s5] sm:$0x1]
        %v556 = vld [vmem:[#allocation2] sm:$0xff]
        %v558 = vperm.slane %v535, 0
        %v560 = vmul.f32 %v556, %v558
        %v562 = vperm.slane %v538, 0
        %v564 = vadd.f32 %v560, %v562
        %v565 = vmax.f32 %v564, 0.0
        %v567 = vperm.slane %v555, 0
        %569 = vmatpush.msra.mxu0 %v554
        %570 = vmatpush.msra.mxu0 %v553
        %571 = vmatpush.msra.mxu0 %v552
        %572 = vmatpush.msra.mxu0 %v551
        %573 = vmatpush.msra.mxu0 %v550
        %574 = vmatpush.msra.mxu0 %v549
        %575 = vmatpush.msra.mxu0 %v548
        %576 = vmatpush.msra.mxu0 %v547
        %577 = vmatpush.msra.mxu0 %v546
        %578 = vmatpush.msra.mxu0 %v545
        %579 = vmatpush.msra.mxu0 %v544
        %580 = vmatpush.msra.mxu0 %v543
        %581 = vmatpush.msra.mxu0 %v542
        %582 = vmatpush.msra.mxu0 %v541
        %583 = vmatpush.msra.mxu0 %v540
        %584 = vmatpush.msra.mxu0 %v539
        %585 = vmatmul.f32.gmra.mxu0 %v565
        %v586 = vpop.f32.mrf.mxu0
        %v587 = vadd.f32 %v567, %v586
        %588 = vdwg.mxu0
        %590 = vrot.lane.b32.xlu0 %v587, 1
        %v591 = vpop.permute.xlu0 %590
        %v593 = vsub.f32 %v587, %v591
        %v594 = vmax.f32 %v593, 0.0
        %v595 = vand.u32 2147483647, %v593
        %v596 = vsub.f32 0.0, %v595
        %v597 = vmul.f32 %v596, 1.442695
        %v598 = vpow.pop %v597
        %v599 = vadd.f32 %v598, 1.0
        %v600 = vlog2.pop %v599
        %v601 = vmul.f32 %v600, 0.6931472
        %v602 = vmul.f32 -0.5, %v598
        %v603 = vadd.f32 %v602, 1.0
        %v604 = vmul.f32 %v603, %v598
        %v605 = vand.u32 2147483647, %v598
        %vm606 = vcmp.lt.f32.partialorder %v605, 0.0004427343
        %v607 = vsel %vm606, %v604, %v601
        %v608 = vadd.f32 %v594, %v607
        %610 = vrot.lane.b32.xlu0 %v608, 127
        %v611 = vpop.permute.xlu0 %610
        %v613 = vadd.f32 %v587, %v611
        %615 = vset.pattern.permute.xlu0 0
        %616 = vperm.xlu0 %615, %v613
        %v617 = vpop.permute.xlu0 %616
        %v619 = vsub.f32 %v587, %v617
        %vm620 = vcmask 15360
        %621 = vst.msk [vmem:[%s6] sm:$0xff] %vm620, %v619
        %v622 = vld [vmem:[#allocation2 + $0x8] sm:$0xff]
        %v623 = vmul.f32 %v622, %v558
        %v624 = vadd.f32 %v623, %v562
        %v625 = vmax.f32 %v624, 0.0
        %626 = vmatpush.msra.mxu0 %v554
        %627 = vmatpush.msra.mxu0 %v553
        %628 = vmatpush.msra.mxu0 %v552
        %629 = vmatpush.msra.mxu0 %v551
        %630 = vmatpush.msra.mxu0 %v550
        %631 = vmatpush.msra.mxu0 %v549
        %632 = vmatpush.msra.mxu0 %v548
        %633 = vmatpush.msra.mxu0 %v547
        %634 = vmatpush.msra.mxu0 %v546
        %635 = vmatpush.msra.mxu0 %v545
        %636 = vmatpush.msra.mxu0 %v544
        %637 = vmatpush.msra.mxu0 %v543
        %638 = vmatpush.msra.mxu0 %v542
        %639 = vmatpush.msra.mxu0 %v541
        %640 = vmatpush.msra.mxu0 %v540
        %641 = vmatpush.msra.mxu0 %v539
        %642 = vmatmul.f32.gmra.mxu0 %v625
        %v643 = vpop.f32.mrf.mxu0
        %v644 = vadd.f32 %v567, %v643
        %645 = vdwg.mxu0
        %647 = vrot.lane.b32.xlu0 %v644, 1
        %v648 = vpop.permute.xlu0 %647
        %v650 = vsub.f32 %v644, %v648
        %v651 = vmax.f32 %v650, 0.0
        %v652 = vand.u32 2147483647, %v650
        %v653 = vsub.f32 0.0, %v652
        %v654 = vmul.f32 %v653, 1.442695
        %v655 = vpow.pop %v654
        %v656 = vadd.f32 %v655, 1.0
        %v657 = vlog2.pop %v656
        %v658 = vmul.f32 %v657, 0.6931472
        %v659 = vmul.f32 -0.5, %v655
        %v660 = vadd.f32 %v659, 1.0
        %v661 = vmul.f32 %v660, %v655
        %v662 = vand.u32 2147483647, %v655
        %vm663 = vcmp.lt.f32.partialorder %v662, 0.0004427343
        %v664 = vsel %vm663, %v661, %v658
        %v665 = vadd.f32 %v651, %v664
        %667 = vrot.lane.b32.xlu0 %v665, 127
        %v668 = vpop.permute.xlu0 %667
        %v670 = vadd.f32 %v644, %v668
        %672 = vset.pattern.permute.xlu0 0
        %673 = vperm.xlu0 %672, %v670
        %v674 = vpop.permute.xlu0 %673
        %v676 = vsub.f32 %v644, %v674
        %677 = vst.msk [vmem:[%s6 + $0x8] sm:$0xff] %vm620, %v676
        %v678 = vld [vmem:[#allocation2 + $0x10] sm:$0xff]
        %v679 = vmul.f32 %v678, %v558
        %v680 = vadd.f32 %v679, %v562
        %v681 = vmax.f32 %v680, 0.0
        %682 = vmatpush.msra.mxu0 %v554
        %683 = vmatpush.msra.mxu0 %v553
        %684 = vmatpush.msra.mxu0 %v552
        %685 = vmatpush.msra.mxu0 %v551
        %686 = vmatpush.msra.mxu0 %v550
        %687 = vmatpush.msra.mxu0 %v549
        %688 = vmatpush.msra.mxu0 %v548
        %689 = vmatpush.msra.mxu0 %v547
        %690 = vmatpush.msra.mxu0 %v546
        %691 = vmatpush.msra.mxu0 %v545
        %692 = vmatpush.msra.mxu0 %v544
        %693 = vmatpush.msra.mxu0 %v543
        %694 = vmatpush.msra.mxu0 %v542
        %695 = vmatpush.msra.mxu0 %v541
        %696 = vmatpush.msra.mxu0 %v540
        %697 = vmatpush.msra.mxu0 %v539
        %698 = vmatmul.f32.gmra.mxu0 %v681
        %v699 = vpop.f32.mrf.mxu0
        %v700 = vadd.f32 %v567, %v699
        %701 = vdwg.mxu0
        %703 = vrot.lane.b32.xlu0 %v700, 1
        %v704 = vpop.permute.xlu0 %703
        %v706 = vsub.f32 %v700, %v704
        %v707 = vmax.f32 %v706, 0.0
        %v708 = vand.u32 2147483647, %v706
        %v709 = vsub.f32 0.0, %v708
        %v710 = vmul.f32 %v709, 1.442695
        %v711 = vpow.pop %v710
        %v712 = vadd.f32 %v711, 1.0
        %v713 = vlog2.pop %v712
        %v714 = vmul.f32 %v713, 0.6931472
        %v715 = vmul.f32 -0.5, %v711
        %v716 = vadd.f32 %v715, 1.0
        %v717 = vmul.f32 %v716, %v711
        %v718 = vand.u32 2147483647, %v711
        %vm719 = vcmp.lt.f32.partialorder %v718, 0.0004427343
        %v720 = vsel %vm719, %v717, %v714
        %v721 = vadd.f32 %v707, %v720
        %723 = vrot.lane.b32.xlu0 %v721, 127
        %v724 = vpop.permute.xlu0 %723
        %v726 = vadd.f32 %v700, %v724
        %728 = vset.pattern.permute.xlu0 0
        %729 = vperm.xlu0 %728, %v726
        %v730 = vpop.permute.xlu0 %729
        %v732 = vsub.f32 %v700, %v730
        %733 = vst.msk [vmem:[%s6 + $0x10] sm:$0xff] %vm620, %v732
        %v734 = vld [vmem:[#allocation2 + $0x18] sm:$0xff]
        %v735 = vmul.f32 %v734, %v558
        %v736 = vadd.f32 %v735, %v562
        %v737 = vmax.f32 %v736, 0.0
        %738 = vmatpush.msra.mxu0 %v554
        %739 = vmatpush.msra.mxu0 %v553
        %740 = vmatpush.msra.mxu0 %v552
        %741 = vmatpush.msra.mxu0 %v551
        %742 = vmatpush.msra.mxu0 %v550
        %743 = vmatpush.msra.mxu0 %v549
        %744 = vmatpush.msra.mxu0 %v548
        %745 = vmatpush.msra.mxu0 %v547
        %746 = vmatpush.msra.mxu0 %v546
        %747 = vmatpush.msra.mxu0 %v545
        %748 = vmatpush.msra.mxu0 %v544
        %749 = vmatpush.msra.mxu0 %v543
        %750 = vmatpush.msra.mxu0 %v542
        %751 = vmatpush.msra.mxu0 %v541
        %752 = vmatpush.msra.mxu0 %v540
        %753 = vmatpush.msra.mxu0 %v539
        %754 = vmatmul.f32.gmra.mxu0 %v737
        %v755 = vpop.f32.mrf.mxu0
        %v756 = vadd.f32 %v567, %v755
        %757 = vdwg.mxu0
        %759 = vrot.lane.b32.xlu0 %v756, 1
        %v760 = vpop.permute.xlu0 %759
        %v762 = vsub.f32 %v756, %v760
        %v763 = vmax.f32 %v762, 0.0
        %v764 = vand.u32 2147483647, %v762
        %v765 = vsub.f32 0.0, %v764
        %v766 = vmul.f32 %v765, 1.442695
        %v767 = vpow.pop %v766
        %v768 = vadd.f32 %v767, 1.0
        %v769 = vlog2.pop %v768
        %v770 = vmul.f32 %v769, 0.6931472
        %v771 = vmul.f32 -0.5, %v767
        %v772 = vadd.f32 %v771, 1.0
        %v773 = vmul.f32 %v772, %v767
        %v774 = vand.u32 2147483647, %v767
        %vm775 = vcmp.lt.f32.partialorder %v774, 0.0004427343
        %v776 = vsel %vm775, %v773, %v770
        %v777 = vadd.f32 %v763, %v776
        %779 = vrot.lane.b32.xlu0 %v777, 127
        %v780 = vpop.permute.xlu0 %779
        %v782 = vadd.f32 %v756, %v780
        %784 = vset.pattern.permute.xlu0 0
        %785 = vperm.xlu0 %784, %v782
        %v786 = vpop.permute.xlu0 %785
        %v788 = vsub.f32 %v756, %v786
        %789 = vst.msk [vmem:[%s6 + $0x18] sm:$0xff] %vm620, %v788
      $region56: #{mlp_domain_classifier.1} parent=43 // pred_fallthru
        _
      // Predicated region
      $region57: #{mlp_domain_classifier.1} parent=43 // pred_check
        %p790 = pneg %p165
      $region58: #{mlp_domain_classifier.1} parent=43 // pred_check_branch
        %792 = sbr.rel (%p790) target = $region60
      $region59: #{mlp_domain_classifier.1} parent=43 // pred_region
        _
      $region60: #{mlp_domain_classifier.1} parent=43 // pred_fallthru
        _
      // Predicated region
      $region61: #{mlp_domain_classifier.1} parent=43 // pred_check
        %p793 = pneg %p165
      $region62: #{mlp_domain_classifier.1} parent=43 // pred_check_branch
        %795 = sbr.rel (%p793) target = $region64
      $region63: #{mlp_domain_classifier.1} parent=43 // pred_region
        _
      $region64: #{mlp_domain_classifier.1} parent=43 // pred_fallthru
        _
    $region44: #{mlp_domain_classifier.1} parent=5 // pred_fallthru
      _
    %p796 = scmp.le.s32.totalorder 2, %s12
    // Predicated region
    $region65: #{mlp_domain_classifier.1} parent=5 // pred_check
      %p797 = pneg %p796
    $region66: #{mlp_domain_classifier.1} parent=5 // pred_check_branch
      %799 = sbr.rel (%p797) target = $region68
    $region67: #{mlp_domain_classifier.1} parent=5 // pred_region
      %s800 = ssub.s32 %s12, 2
    $region68: #{mlp_domain_classifier.1} parent=5 // pred_fallthru
      _
  $region6: #{mlp_domain_classifier.1} parent=0 // loop_footer
    %s16 = sadd.s32 1, %s12
  $region7: #{mlp_domain_classifier.1} parent=0 // loop_footer_branch
    %11 = sbr.rel target = $region3
  $region8: #{mlp_domain_classifier.1} parent=0 // loop_exit
    _

</llo_original>
